<compile_context>
chip_gen: v6e
topology: v6e:2x2x1
jax: 0.10.0
libtpu: 0.0.40
codegen_flags: <defaults>
</compile_context>

<pallas_src>
import jax
import jax.numpy as jnp
from jax.experimental import pallas as pl
from jax.experimental.pallas import tpu as pltpu

INPUT_SIZE = 15 * 2            # 30
LINEAR_SIZE = 256


def _round_up(n, m):
    return ((n + m - 1) // m) * m


def _disc_kernel(x_ref, w1_ref, b1_ref, w2_ref, b2_ref, w3_ref, b3_ref, o_ref):
    # Entire hot path fused: 3 bf16 MXU matmuls with f32 accumulation.
    # Bias adds in f32 on the VPU; ReLU applied after the bf16 downcast
    # (equivalent, and half the VALU work on chips with a bf16 VPU).
    x = x_ref[...].astype(jnp.bfloat16)

    y = jnp.dot(x, w1_ref[...], preferred_element_type=jnp.float32) + b1_ref[...]
    y = jnp.maximum(y.astype(jnp.bfloat16), 0.0)

    y = jnp.dot(y, w2_ref[...], preferred_element_type=jnp.float32) + b2_ref[...]
    y = jnp.maximum(y.astype(jnp.bfloat16), 0.0)

    y = jnp.dot(y, w3_ref[...], preferred_element_type=jnp.float32) + b3_ref[...]
    o_ref[...] = y.astype(o_ref.dtype)


def discriminate_model(x, params, tm=1024, out_dtype=jnp.bfloat16):
    """x: (B, 30) float32 -> (B, 256) `out_dtype` (default bf16).

    params = (w1, b1, w2, b2, w3, b3) with
      w1: (30, 256) bf16, w2/w3: (256, 256) bf16, b1/b2/b3: (1, 256) f32.
    """
    w1, b1, w2, b2, w3, b3 = params
    B, F = x.shape
    assert F == INPUT_SIZE, F

    # Tile-size selection (no batch padding; the last tile may be partial and
    # Pallas masks its out-of-bounds loads/stores):
    #   * quantum 16 rows keeps bf16 output tiles packed-sublane friendly,
    #   * default as large as possible (amortize per-step overhead),
    #   * but split into >= 2 grid steps when the batch allows it so the
    #     "parallel" grid axis can use both TensorCores on v7x.
    b8 = _round_up(B, 8)
    q = 16 if b8 >= 16 else 8
    tm = max(q, min(_round_up(tm, q), _round_up(b8, q)))
    if pl.cdiv(b8, tm) < 2 and b8 >= 2 * q:
        tm = _round_up(pl.cdiv(b8, 2), q)

    grid = (pl.cdiv(B, tm),)
    const = lambda shape: pl.BlockSpec(shape, lambda i: (0, 0))  # resident weights

    out = pl.pallas_call(
        _disc_kernel,
        out_shape=jax.ShapeDtypeStruct((B, LINEAR_SIZE), out_dtype),
        grid=grid,
        in_specs=[
            pl.BlockSpec((tm, INPUT_SIZE), lambda i: (i, 0)),  # x tile (B, 30)
            const(w1.shape),   # W1 (30, 256)   bf16
            const(b1.shape),   # b1 (1, 256)    f32
            const(w2.shape),   # W2 (256, 256)  bf16
            const(b2.shape),   # b2 (1, 256)    f32
            const(w3.shape),   # W3 (256, 256)  bf16
            const(b3.shape),   # b3 (1, 256)    f32
        ],
        out_specs=pl.BlockSpec((tm, LINEAR_SIZE), lambda i: (i, 0)),
        compiler_params=pltpu.CompilerParams(
            dimension_semantics=("parallel",),
        ),
    )(x, w1, b1, w2, b2, w3, b3)

    return out


def init_params(key):
    """PyTorch Linear default init U(-1/sqrt(fan_in), 1/sqrt(fan_in)).

    Weights stored bf16, biases f32.
    """
    ks = jax.random.split(key, 6)

    def uniform(k, shape, fan_in):
        bound = 1.0 / jnp.sqrt(jnp.float32(fan_in))
        return jax.random.uniform(k, shape, jnp.float32, -bound, bound)

    w1 = uniform(ks[0], (INPUT_SIZE, LINEAR_SIZE), INPUT_SIZE)
    b1 = uniform(ks[1], (1, LINEAR_SIZE), INPUT_SIZE)
    w2 = uniform(ks[2], (LINEAR_SIZE, LINEAR_SIZE), LINEAR_SIZE)
    b2 = uniform(ks[3], (1, LINEAR_SIZE), LINEAR_SIZE)
    w3 = uniform(ks[4], (LINEAR_SIZE, LINEAR_SIZE), LINEAR_SIZE)
    b3 = uniform(ks[5], (1, LINEAR_SIZE), LINEAR_SIZE)
    return (w1.astype(jnp.bfloat16), b1,
            w2.astype(jnp.bfloat16), b2,
            w3.astype(jnp.bfloat16), b3)


def reference(x, params):
    """Pure-JAX reference mimicking the kernel's bf16/f32 mixed precision."""
    w1, b1, w2, b2, w3, b3 = params
    f32 = lambda a: a.astype(jnp.float32)
    bf16 = lambda a: a.astype(jnp.bfloat16)
    y = f32(bf16(x)) @ f32(w1) + b1
    y = jnp.maximum(bf16(y), jnp.bfloat16(0.0))
    y = f32(y) @ f32(w2) + b2
    y = jnp.maximum(bf16(y), jnp.bfloat16(0.0))
    y = f32(y) @ f32(w3) + b3
    return bf16(y)


if __name__ == "__main__":
    key = jax.random.PRNGKey(0)
    k_x, k_p, k_x2 = jax.random.split(key, 3)
    params = init_params(k_p)

    # Small batch (single grid step, tile == full batch).
    B = 8
    x = jax.random.normal(k_x, (B, INPUT_SIZE), jnp.float32)
    out = jax.block_until_ready(discriminate_model(x, params))
    ref = reference(x, params)
    assert out.shape == (B, LINEAR_SIZE), out.shape
    assert out.dtype == jnp.bfloat16, out.dtype
    assert jnp.allclose(out.astype(jnp.float32), ref.astype(jnp.float32),
                        atol=2e-2, rtol=2e-2), "mismatch vs JAX reference (B=8)"

    # Awkward batch: not a multiple of the tile (or of 8) -> exercises the
    # two-step grid plus Pallas partial-block masking on the last tile.
    B2 = 601
    x2 = jax.random.normal(k_x2, (B2, INPUT_SIZE), jnp.float32)
    out2 = jax.block_until_ready(discriminate_model(x2, params))
    ref2 = reference(x2, params)
    assert out2.shape == (B2, LINEAR_SIZE), out2.shape
    assert jnp.allclose(out2.astype(jnp.float32), ref2.astype(jnp.float32),
                        atol=2e-2, rtol=2e-2), "mismatch vs JAX reference (B=601)"

    print("KERNEL_OK")
</pallas_src>

<mosaic_0001>
module attributes {stable_mosaic.version = 11 : i64} {
  func.func @_disc_kernel(%arg0: i32, %arg1: memref<8x30xf32, #tpu.memory_space<vmem>>, %arg2: memref<30x256xbf16, #tpu.memory_space<vmem>>, %arg3: memref<1x256xf32, #tpu.memory_space<vmem>>, %arg4: memref<256x256xbf16, #tpu.memory_space<vmem>>, %arg5: memref<1x256xf32, #tpu.memory_space<vmem>>, %arg6: memref<256x256xbf16, #tpu.memory_space<vmem>>, %arg7: memref<1x256xf32, #tpu.memory_space<vmem>>, %arg8: memref<8x256xbf16, #tpu.memory_space<vmem>>) attributes {dimension_semantics = [#tpu.dimension_semantics<parallel>], iteration_bounds = array<i64: 1>, scalar_prefetch = 0 : i64, scratch_operands = 0 : i64, tpu.core_type = #tpu.core_type<tc>, window_params = [{transform_indices = @transform_0, window_bounds = array<i64: 8, 30>}, {pipeline_mode = #tpu.pipeline_mode<synchronous>, transform_indices = @transform_1, window_bounds = array<i64: 30, 256>}, {pipeline_mode = #tpu.pipeline_mode<synchronous>, transform_indices = @transform_2, window_bounds = array<i64: 1, 256>}, {pipeline_mode = #tpu.pipeline_mode<synchronous>, transform_indices = @transform_3, window_bounds = array<i64: 256, 256>}, {pipeline_mode = #tpu.pipeline_mode<synchronous>, transform_indices = @transform_4, window_bounds = array<i64: 1, 256>}, {pipeline_mode = #tpu.pipeline_mode<synchronous>, transform_indices = @transform_5, window_bounds = array<i64: 256, 256>}, {pipeline_mode = #tpu.pipeline_mode<synchronous>, transform_indices = @transform_6, window_bounds = array<i64: 1, 256>}, {transform_indices = @transform_7, window_bounds = array<i64: 8, 256>}]} {
    %c0 = arith.constant 0 : index
    %c0_0 = arith.constant 0 : index
    %0 = vector.load %arg1[%c0, %c0_0] : memref<8x30xf32, #tpu.memory_space<vmem>>, vector<8x30xf32>
    %1 = arith.truncf %0 : vector<8x30xf32> to vector<8x30xbf16>
    %c0_1 = arith.constant 0 : index
    %c0_2 = arith.constant 0 : index
    %2 = vector.load %arg2[%c0_1, %c0_2] : memref<30x256xbf16, #tpu.memory_space<vmem>>, vector<30x256xbf16>
    %cst = arith.constant dense<0.000000e+00> : vector<8x256xf32>
    %3 = tpu.matmul %1, %2, %cst {dimension_numbers = #tpu.dot_dimension_numbers<[1], [0], [0], [1], [0, 0, 1, 1], [], []>} : vector<8x30xbf16>, vector<30x256xbf16>, vector<8x256xf32> -> vector<8x256xf32>
    %c0_3 = arith.constant 0 : index
    %c0_4 = arith.constant 0 : index
    %4 = vector.load %arg3[%c0_3, %c0_4] : memref<1x256xf32, #tpu.memory_space<vmem>>, vector<1x256xf32>
    %5 = vector.broadcast %4 : vector<1x256xf32> to vector<8x256xf32>
    %6 = arith.addf %3, %5 : vector<8x256xf32>
    %7 = arith.truncf %6 : vector<8x256xf32> to vector<8x256xbf16>
    %cst_5 = arith.constant 0.000000e+00 : bf16
    %8 = vector.broadcast %cst_5 : bf16 to vector<8x256xbf16>
    %9 = arith.maximumf %7, %8 : vector<8x256xbf16>
    %c0_6 = arith.constant 0 : index
    %c0_7 = arith.constant 0 : index
    %10 = vector.load %arg4[%c0_6, %c0_7] : memref<256x256xbf16, #tpu.memory_space<vmem>>, vector<256x256xbf16>
    %cst_8 = arith.constant dense<0.000000e+00> : vector<8x256xf32>
    %11 = tpu.matmul %9, %10, %cst_8 {dimension_numbers = #tpu.dot_dimension_numbers<[1], [0], [0], [1], [0, 0, 1, 1], [], []>} : vector<8x256xbf16>, vector<256x256xbf16>, vector<8x256xf32> -> vector<8x256xf32>
    %c0_9 = arith.constant 0 : index
    %c0_10 = arith.constant 0 : index
    %12 = vector.load %arg5[%c0_9, %c0_10] : memref<1x256xf32, #tpu.memory_space<vmem>>, vector<1x256xf32>
    %13 = vector.broadcast %12 : vector<1x256xf32> to vector<8x256xf32>
    %14 = arith.addf %11, %13 : vector<8x256xf32>
    %15 = arith.truncf %14 : vector<8x256xf32> to vector<8x256xbf16>
    %cst_11 = arith.constant 0.000000e+00 : bf16
    %16 = vector.broadcast %cst_11 : bf16 to vector<8x256xbf16>
    %17 = arith.maximumf %15, %16 : vector<8x256xbf16>
    %c0_12 = arith.constant 0 : index
    %c0_13 = arith.constant 0 : index
    %18 = vector.load %arg6[%c0_12, %c0_13] : memref<256x256xbf16, #tpu.memory_space<vmem>>, vector<256x256xbf16>
    %cst_14 = arith.constant dense<0.000000e+00> : vector<8x256xf32>
    %19 = tpu.matmul %17, %18, %cst_14 {dimension_numbers = #tpu.dot_dimension_numbers<[1], [0], [0], [1], [0, 0, 1, 1], [], []>} : vector<8x256xbf16>, vector<256x256xbf16>, vector<8x256xf32> -> vector<8x256xf32>
    %c0_15 = arith.constant 0 : index
    %c0_16 = arith.constant 0 : index
    %20 = vector.load %arg7[%c0_15, %c0_16] : memref<1x256xf32, #tpu.memory_space<vmem>>, vector<1x256xf32>
    %21 = vector.broadcast %20 : vector<1x256xf32> to vector<8x256xf32>
    %22 = arith.addf %19, %21 : vector<8x256xf32>
    %23 = arith.truncf %22 : vector<8x256xf32> to vector<8x256xbf16>
    %c0_17 = arith.constant 0 : index
    %c0_18 = arith.constant 0 : index
    %24 = vector.load %arg8[%c0_17, %c0_18] : memref<8x256xbf16, #tpu.memory_space<vmem>>, vector<8x256xbf16>
    tpu.vector_store %arg8[%c0_17, %c0_18], %23 {strides = array<i32>} : memref<8x256xbf16, #tpu.memory_space<vmem>>, vector<8x256xbf16>,
    return
  }
  func.func @transform_0(%arg0: i32) -> (i32, i32) {
    %c0_i32 = arith.constant 0 : i32
    %c0_i32_0 = arith.constant 0 : i32
    return %arg0, %c0_i32 : i32, i32
  }
  func.func @transform_1(%arg0: i32) -> (i32, i32) {
    %c0_i32 = arith.constant 0 : i32
    %c0_i32_0 = arith.constant 0 : i32
    %c0_i32_1 = arith.constant 0 : i32
    return %c0_i32, %c0_i32_0 : i32, i32
  }
  func.func @transform_2(%arg0: i32) -> (i32, i32) {
    %c0_i32 = arith.constant 0 : i32
    %c0_i32_0 = arith.constant 0 : i32
    %c0_i32_1 = arith.constant 0 : i32
    return %c0_i32, %c0_i32_0 : i32, i32
  }
  func.func @transform_3(%arg0: i32) -> (i32, i32) {
    %c0_i32 = arith.constant 0 : i32
    %c0_i32_0 = arith.constant 0 : i32
    %c0_i32_1 = arith.constant 0 : i32
    return %c0_i32, %c0_i32_0 : i32, i32
  }
  func.func @transform_4(%arg0: i32) -> (i32, i32) {
    %c0_i32 = arith.constant 0 : i32
    %c0_i32_0 = arith.constant 0 : i32
    %c0_i32_1 = arith.constant 0 : i32
    return %c0_i32, %c0_i32_0 : i32, i32
  }
  func.func @transform_5(%arg0: i32) -> (i32, i32) {
    %c0_i32 = arith.constant 0 : i32
    %c0_i32_0 = arith.constant 0 : i32
    %c0_i32_1 = arith.constant 0 : i32
    return %c0_i32, %c0_i32_0 : i32, i32
  }
  func.func @transform_6(%arg0: i32) -> (i32, i32) {
    %c0_i32 = arith.constant 0 : i32
    %c0_i32_0 = arith.constant 0 : i32
    %c0_i32_1 = arith.constant 0 : i32
    return %c0_i32, %c0_i32_0 : i32, i32
  }
  func.func @transform_7(%arg0: i32) -> (i32, i32) {
    %c0_i32 = arith.constant 0 : i32
    %c0_i32_0 = arith.constant 0 : i32
    return %arg0, %c0_i32 : i32, i32
  }
}

</mosaic_0001>

<llo_original>
// kernel: tpu_custom_call.1
$region0: #{tpu_custom_call.1}
  #allocation0 [shape = 'u32[]', space=smem, size = 0x4, offset = 0x4, fixed_abs, tag = 'smem constant byte address 0x4 - core index']
  #allocation1 [shape = 'u32[144,128]{1,0:T(1,128)}', space=vmem, size = 0x12000, scoped, tag = 'internal scratch']
  %s0 = inlined_call_operand.hbm [shape: f32[8,30], index: 0, kind: input, shape index: {}]
  %s1 = inlined_call_operand.hbm [shape: bf16[30,256], index: 1, kind: input, shape index: {}]
  %s2 = inlined_call_operand.vmem [shape: f32[1,256], index: 2, kind: input, shape index: {}]
  %s3 = inlined_call_operand.hbm [shape: bf16[256,256], index: 3, kind: input, shape index: {}]
  %s4 = inlined_call_operand.vmem [shape: f32[1,256], index: 4, kind: input, shape index: {}]
  %s5 = inlined_call_operand.hbm [shape: bf16[256,256], index: 5, kind: input, shape index: {}]
  %s6 = inlined_call_operand.vmem [shape: f32[1,256], index: 6, kind: input, shape index: {}]
  %s7 = inlined_call_operand.hbm [shape: bf16[8,256], index: 7, kind: output, shape index: {}]
  %s8 = sld [smem:[#allocation0]]
  $region54: #{tpu_custom_call.1} parent=0
    _
  %s10 = ssub.s32 1, %s8
  %s11 = scalar_select 0, %s10, %s8
  $region1: #{tpu_custom_call.1} parent=0
    #allocation2 [shape = 'u8[4096]{0}', space=vmem, size = 0x1000, scoped, tag = 'input window, operand 0, single buffered']
    #allocation3 [shape = 's32[1]{0}', space=sflag, size = 0x4, scoped, tag = 'scoped memory for tpu_custom_call.1']
    #allocation4 [shape = 's32[1]{0}', space=sflag, size = 0x4, scoped, tag = 'scoped memory for tpu_custom_call.1']
    #allocation5 [shape = 'u8[16384]{0}', space=vmem, size = 0x4000, scoped, tag = 'input window, operand 1, single buffered']
    #allocation6 [shape = 's32[1]{0}', space=sflag, size = 0x4, scoped, tag = 'scoped memory for tpu_custom_call.1']
    #allocation7 [shape = 'u8[131072]{0}', space=vmem, size = 0x20000, scoped, tag = 'input window, operand 3, single buffered']
    #allocation8 [shape = 'u8[131072]{0}', space=vmem, size = 0x20000, scoped, tag = 'input window, operand 5, single buffered']
    #allocation9 [shape = 's32[1]{0}', space=sflag, size = 0x4, scoped, tag = 'scoped memory for tpu_custom_call.1']
    #allocation10 [shape = 'u8[4096]{0}', space=vmem, size = 0x1000, scoped, tag = 'output window, operand 0, single buffered']
    %12 = vsyncpa [#allocation3], 0
    %13 = vsyncpa [#allocation6], 0
    %14 = vsyncpa [#allocation9], 0
    %15 = vsyncpa [#allocation4], 0
    // Predicated region
    $region2: #{tpu_custom_call.1} parent=1 // pred_check
      _
    $region3: #{tpu_custom_call.1} parent=1 // pred_check_branch
      %17 = sbr.rel (0) target = $region5
    $region4: #{tpu_custom_call.1} parent=1 // pred_region
      %s19 = ssub.s32 128, 128
      %20 = vsyncadd [#allocation3], %s19
      %s22 = sshll.u32 [#allocation2], 4
      %s23 = int_to_ptr.vmem [resolvable:$true] %s22
      %25 = dma.hbm_to_vmem [thread:$0]  %s0, 128, %s23, [#allocation3]
    $region5: #{tpu_custom_call.1} parent=1 // pred_fallthru
      _
    // Predicated region
    $region6: #{tpu_custom_call.1} parent=1 // pred_check
      _
    $region7: #{tpu_custom_call.1} parent=1 // pred_check_branch
      %27 = sbr.rel (0) target = $region9
    $region8: #{tpu_custom_call.1} parent=1 // pred_region
      %s29 = ssub.s32 512, 512
      %30 = vsyncadd [#allocation6], %s29
      %s31 = sshll.u32 [#allocation5], 4
      %s32 = int_to_ptr.vmem [resolvable:$true] %s31
      %37 = dma.hbm_to_vmem [thread:$0]  %s1, 512, %s32, [#allocation6], 128, 128, 8
    $region9: #{tpu_custom_call.1} parent=1 // pred_fallthru
      _
    // Predicated region
    $region10: #{tpu_custom_call.1} parent=1 // pred_check
      _
    $region11: #{tpu_custom_call.1} parent=1 // pred_check_branch
      %39 = sbr.rel (0) target = $region13
    $region12: #{tpu_custom_call.1} parent=1 // pred_region
      _
    $region13: #{tpu_custom_call.1} parent=1 // pred_fallthru
      _
    // Predicated region
    $region14: #{tpu_custom_call.1} parent=1 // pred_check
      _
    $region15: #{tpu_custom_call.1} parent=1 // pred_check_branch
      %41 = sbr.rel (0) target = $region17
    $region16: #{tpu_custom_call.1} parent=1 // pred_region
      %s43 = ssub.s32 4096, 4096
      %44 = vsyncadd [#allocation6], %s43
      %s45 = sshll.u32 [#allocation7], 4
      %s46 = int_to_ptr.vmem [resolvable:$true] %s45
      %51 = dma.hbm_to_vmem [thread:$0]  %s3, 4096, %s46, [#allocation6], 128, 128, 8
    $region17: #{tpu_custom_call.1} parent=1 // pred_fallthru
      _
    // Predicated region
    $region18: #{tpu_custom_call.1} parent=1 // pred_check
      _
    $region19: #{tpu_custom_call.1} parent=1 // pred_check_branch
      %53 = sbr.rel (0) target = $region21
    $region20: #{tpu_custom_call.1} parent=1 // pred_region
      _
    $region21: #{tpu_custom_call.1} parent=1 // pred_fallthru
      _
    // Predicated region
    $region22: #{tpu_custom_call.1} parent=1 // pred_check
      _
    $region23: #{tpu_custom_call.1} parent=1 // pred_check_branch
      %55 = sbr.rel (0) target = $region25
    $region24: #{tpu_custom_call.1} parent=1 // pred_region
      %s57 = ssub.s32 4096, 4096
      %58 = vsyncadd [#allocation9], %s57
      %s59 = sshll.u32 [#allocation8], 4
      %s60 = int_to_ptr.vmem [resolvable:$true] %s59
      %65 = dma.hbm_to_vmem [thread:$0]  %s5, 4096, %s60, [#allocation9], 128, 128, 8
    $region25: #{tpu_custom_call.1} parent=1 // pred_fallthru
      _
    // Predicated region
    $region26: #{tpu_custom_call.1} parent=1 // pred_check
      _
    $region27: #{tpu_custom_call.1} parent=1 // pred_check_branch
      %67 = sbr.rel (0) target = $region29
    $region28: #{tpu_custom_call.1} parent=1 // pred_region
      _
    $region29: #{tpu_custom_call.1} parent=1 // pred_fallthru
      _
    // Predicated region
    $region30: #{tpu_custom_call.1} parent=1 // pred_check
      _
    $region31: #{tpu_custom_call.1} parent=1 // pred_check_branch
      %69 = sbr.rel (0) target = $region33
    $region32: #{tpu_custom_call.1} parent=1 // pred_region
      %70 = dma.done [#allocation3], 128
    $region33: #{tpu_custom_call.1} parent=1 // pred_fallthru
      _
    // Predicated region
    $region34: #{tpu_custom_call.1} parent=1 // pred_check
      _
    $region35: #{tpu_custom_call.1} parent=1 // pred_check_branch
      %72 = sbr.rel (0) target = $region37
    $region36: #{tpu_custom_call.1} parent=1 // pred_region
      %73 = dma.done [#allocation6], 512
    $region37: #{tpu_custom_call.1} parent=1 // pred_fallthru
      _
    // Predicated region
    $region38: #{tpu_custom_call.1} parent=1 // pred_check
      _
    $region39: #{tpu_custom_call.1} parent=1 // pred_check_branch
      %75 = sbr.rel (0) target = $region41
    $region40: #{tpu_custom_call.1} parent=1 // pred_region
      %76 = dma.done [#allocation6], 4096
    $region41: #{tpu_custom_call.1} parent=1 // pred_fallthru
      _
    // Predicated region
    $region42: #{tpu_custom_call.1} parent=1 // pred_check
      _
    $region43: #{tpu_custom_call.1} parent=1 // pred_check_branch
      %78 = sbr.rel (0) target = $region45
    $region44: #{tpu_custom_call.1} parent=1 // pred_region
      %79 = dma.done [#allocation9], 4096
    $region45: #{tpu_custom_call.1} parent=1 // pred_fallthru
      _
    %v81 = vld [vmem:[#allocation2] sm:$0xff]
    %v82 = vpack.c.bf16 %v81, %v81
    %v83 = vld [vmem:[#allocation5] sm:$0xff]
    %v84 = vld [vmem:[#allocation5 + $0x8] sm:$0xff]
    %v85 = vld [vmem:[#allocation5 + $0x10] sm:$0xff]
    %v86 = vld [vmem:[#allocation5 + $0x18] sm:$0x77]
    %v87 = vld [vmem:[%s2] sm:$0x3]
    %v89 = vlaneseq
    %v90 = vshrl.u32 %v89, 7
    %v91 = vsub.s32 0, %v90
    %v92 = vrot.slane %v87, %v91
    %v93 = vlaneseq
    %v94 = vshrl.u32 %v93, 7
    %v95 = vsub.s32 1, %v94
    %v96 = vrot.slane %v87, %v95
    %v103 = vunpack.c.l.b16 %v83
    %v104 = vunpack.c.h.b16 %v83
    %v105 = vunpack.c.l.b16 %v84
    %v106 = vunpack.c.h.b16 %v84
    %v107 = vunpack.c.l.b16 %v85
    %v108 = vunpack.c.h.b16 %v85
    %v109 = vunpack.c.l.b16 %v86
    %v110 = vunpack.c.h.b16 %v86
    %v111 = vpack.c.b16 %v105, %v103
    %v112 = vpack.c.b16 %v106, %v104
    %v113 = vpack.c.b16 %v109, %v107
    %v114 = vpack.c.b16 %v110, %v108
    %vm117 = vcmask 244736
    %v119 = vsel %vm117, %v82, 0
    %vm121 = vcmask 1046528
    %v123 = vsel %vm121, %v113, 0
    %v126 = vsel %vm121, %v114, 0
    %128 = vmatprep.subr.bf16.mxu0 0
    %129 = vmatpush1.bf16.msra.mxu0 0
    %130 = vmatprep.subr.bf16.mxu0 0
    %131 = vmatpush1.bf16.msra.mxu0 0
    %132 = vmatprep.subr.bf16.mxu0 0
    %133 = vmatpush1.bf16.msra.mxu0 0
    %134 = vmatprep.subr.bf16.mxu0 0
    %135 = vmatpush1.bf16.msra.mxu0 0
    %136 = vmatprep.subr.bf16.mxu0 0
    %137 = vmatpush1.bf16.msra.mxu0 0
    %138 = vmatprep.subr.bf16.mxu0 0
    %139 = vmatpush1.bf16.msra.mxu0 0
    %140 = vmatprep.subr.bf16.mxu0 %v126
    %141 = vmatpush1.bf16.msra.mxu0 %v123
    %142 = vmatprep.subr.bf16.mxu0 %v112
    %143 = vmatpush1.bf16.msra.mxu0 %v111
    %144 = vmatprep.subr.bf16.mxu0 0
    %145 = vmatpush2.bf16.msra.mxu0 0
    %146 = vmatprep.subr.bf16.mxu0 0
    %147 = vmatpush2.bf16.msra.mxu0 0
    %148 = vmatprep.subr.bf16.mxu0 0
    %149 = vmatpush2.bf16.msra.mxu0 0
    %150 = vmatprep.subr.bf16.mxu0 0
    %151 = vmatpush2.bf16.msra.mxu0 0
    %152 = vmatprep.subr.bf16.mxu0 0
    %153 = vmatpush2.bf16.msra.mxu0 0
    %154 = vmatprep.subr.bf16.mxu0 0
    %155 = vmatpush2.bf16.msra.mxu0 0
    %156 = vmatprep.subr.bf16.mxu0 0
    %157 = vmatpush2.bf16.msra.mxu0 0
    %158 = vmatprep.subr.bf16.mxu0 0
    %159 = vmatpush2.bf16.msra.mxu0 0
    %160 = vmatprep.mubr.bf16.mxu0 0
    %161 = vmatmul.mubr.bf16.gmra.mxu0 %v119
    %v162 = vpop.f32.mrf.mxu0
    %v163 = vadd.f32 %v92, %v162
    %v164 = vpop.f32.mrf.mxu0
    %v165 = vadd.f32 %v96, %v164
    %v166 = vpop.f32.mrf.mxu0
    %v167 = vpop.f32.mrf.mxu0
    %168 = vdwg.mxu0
    %v169 = vpack.c.bf16 %v163, %v163
    %v170 = vpack.c.bf16 %v165, %v165
    %v171 = vmax.bf16 %v169, 0
    %v172 = vmax.bf16 %v170, 0
    %v173 = vld [vmem:[#allocation7] sm:$0xff]
    %v174 = vld [vmem:[#allocation7 + $0x8] sm:$0xff]
    %v175 = vld [vmem:[#allocation7 + $0x10] sm:$0xff]
    %v176 = vld [vmem:[#allocation7 + $0x18] sm:$0xff]
    %v177 = vld [vmem:[#allocation7 + $0x20] sm:$0xff]
    %v178 = vld [vmem:[#allocation7 + $0x28] sm:$0xff]
    %v179 = vld [vmem:[#allocation7 + $0x30] sm:$0xff]
    %v180 = vld [vmem:[#allocation7 + $0x38] sm:$0xff]
    %v181 = vld [vmem:[#allocation7 + $0x40] sm:$0xff]
    %v182 = vld [vmem:[#allocation7 + $0x48] sm:$0xff]
    %v183 = vld [vmem:[#allocation7 + $0x50] sm:$0xff]
    %v184 = vld [vmem:[#allocation7 + $0x58] sm:$0xff]
    %v185 = vld [vmem:[#allocation7 + $0x60] sm:$0xff]
    %v186 = vld [vmem:[#allocation7 + $0x68] sm:$0xff]
    %v187 = vld [vmem:[#allocation7 + $0x70] sm:$0xff]
    %v188 = vld [vmem:[#allocation7 + $0x78] sm:$0xff]
    %v189 = vld [vmem:[#allocation7 + $0x80] sm:$0xff]
    %v190 = vld [vmem:[#allocation7 + $0x88] sm:$0xff]
    %v191 = vld [vmem:[#allocation7 + $0x90] sm:$0xff]
    %v192 = vld [vmem:[#allocation7 + $0x98] sm:$0xff]
    %v193 = vld [vmem:[#allocation7 + $0xa0] sm:$0xff]
    %v194 = vld [vmem:[#allocation7 + $0xa8] sm:$0xff]
    %v195 = vld [vmem:[#allocation7 + $0xb0] sm:$0xff]
    %v196 = vld [vmem:[#allocation7 + $0xb8] sm:$0xff]
    %v197 = vld [vmem:[#allocation7 + $0xc0] sm:$0xff]
    %v198 = vld [vmem:[#allocation7 + $0xc8] sm:$0xff]
    %v199 = vld [vmem:[#allocation7 + $0xd0] sm:$0xff]
    %v200 = vld [vmem:[#allocation7 + $0xd8] sm:$0xff]
    %v201 = vld [vmem:[#allocation7 + $0xe0] sm:$0xff]
    %v202 = vld [vmem:[#allocation7 + $0xe8] sm:$0xff]
    %v203 = vld [vmem:[#allocation7 + $0xf0] sm:$0xff]
    %v204 = vld [vmem:[#allocation7 + $0xf8] sm:$0xff]
    %v205 = vld [vmem:[%s4] sm:$0x3]
    %v207 = vlaneseq
    %v208 = vshrl.u32 %v207, 7
    %v209 = vsub.s32 0, %v208
    %v210 = vrot.slane %v205, %v209
    %v211 = vlaneseq
    %v212 = vshrl.u32 %v211, 7
    %v213 = vsub.s32 1, %v212
    %v214 = vrot.slane %v205, %v213
    %v249 = vunpack.c.l.b16 %v173
    %v250 = vunpack.c.h.b16 %v173
    %v251 = vunpack.c.l.b16 %v174
    %v252 = vunpack.c.h.b16 %v174
    %v253 = vunpack.c.l.b16 %v175
    %v254 = vunpack.c.h.b16 %v175
    %v255 = vunpack.c.l.b16 %v176
    %v256 = vunpack.c.h.b16 %v176
    %v257 = vunpack.c.l.b16 %v177
    %v258 = vunpack.c.h.b16 %v177
    %v259 = vunpack.c.l.b16 %v178
    %v260 = vunpack.c.h.b16 %v178
    %v261 = vunpack.c.l.b16 %v179
    %v262 = vunpack.c.h.b16 %v179
    %v263 = vunpack.c.l.b16 %v180
    %v264 = vunpack.c.h.b16 %v180
    %v265 = vunpack.c.l.b16 %v181
    %v266 = vunpack.c.h.b16 %v181
    %v267 = vunpack.c.l.b16 %v182
    %v268 = vunpack.c.h.b16 %v182
    %v269 = vunpack.c.l.b16 %v183
    %v270 = vunpack.c.h.b16 %v183
    %v271 = vunpack.c.l.b16 %v184
    %v272 = vunpack.c.h.b16 %v184
    %v273 = vunpack.c.l.b16 %v185
    %v274 = vunpack.c.h.b16 %v185
    %v275 = vunpack.c.l.b16 %v186
    %v276 = vunpack.c.h.b16 %v186
    %v277 = vunpack.c.l.b16 %v187
    %v278 = vunpack.c.h.b16 %v187
    %v279 = vunpack.c.l.b16 %v188
    %v280 = vunpack.c.h.b16 %v188
    %v281 = vunpack.c.l.b16 %v189
    %v282 = vunpack.c.h.b16 %v189
    %v283 = vunpack.c.l.b16 %v190
    %v284 = vunpack.c.h.b16 %v190
    %v285 = vunpack.c.l.b16 %v191
    %v286 = vunpack.c.h.b16 %v191
    %v287 = vunpack.c.l.b16 %v192
    %v288 = vunpack.c.h.b16 %v192
    %v289 = vunpack.c.l.b16 %v193
    %v290 = vunpack.c.h.b16 %v193
    %v291 = vunpack.c.l.b16 %v194
    %v292 = vunpack.c.h.b16 %v194
    %v293 = vunpack.c.l.b16 %v195
    %v294 = vunpack.c.h.b16 %v195
    %v295 = vunpack.c.l.b16 %v196
    %v296 = vunpack.c.h.b16 %v196
    %v297 = vunpack.c.l.b16 %v197
    %v298 = vunpack.c.h.b16 %v197
    %v299 = vunpack.c.l.b16 %v198
    %v300 = vunpack.c.h.b16 %v198
    %v301 = vunpack.c.l.b16 %v199
    %v302 = vunpack.c.h.b16 %v199
    %v303 = vunpack.c.l.b16 %v200
    %v304 = vunpack.c.h.b16 %v200
    %v305 = vunpack.c.l.b16 %v201
    %v306 = vunpack.c.h.b16 %v201
    %v307 = vunpack.c.l.b16 %v202
    %v308 = vunpack.c.h.b16 %v202
    %v309 = vunpack.c.l.b16 %v203
    %v310 = vunpack.c.h.b16 %v203
    %v311 = vunpack.c.l.b16 %v204
    %v312 = vunpack.c.h.b16 %v204
    %v313 = vpack.c.b16 %v251, %v249
    %v314 = vpack.c.b16 %v252, %v250
    %v315 = vpack.c.b16 %v255, %v253
    %v316 = vpack.c.b16 %v256, %v254
    %v317 = vpack.c.b16 %v259, %v257
    %v318 = vpack.c.b16 %v260, %v258
    %v319 = vpack.c.b16 %v263, %v261
    %v320 = vpack.c.b16 %v264, %v262
    %v321 = vpack.c.b16 %v267, %v265
    %v322 = vpack.c.b16 %v268, %v266
    %v323 = vpack.c.b16 %v271, %v269
    %v324 = vpack.c.b16 %v272, %v270
    %v325 = vpack.c.b16 %v275, %v273
    %v326 = vpack.c.b16 %v276, %v274
    %v327 = vpack.c.b16 %v279, %v277
    %v328 = vpack.c.b16 %v280, %v278
    %v329 = vpack.c.b16 %v283, %v281
    %v330 = vpack.c.b16 %v284, %v282
    %v331 = vpack.c.b16 %v287, %v285
    %v332 = vpack.c.b16 %v288, %v286
    %v333 = vpack.c.b16 %v291, %v289
    %v334 = vpack.c.b16 %v292, %v290
    %v335 = vpack.c.b16 %v295, %v293
    %v336 = vpack.c.b16 %v296, %v294
    %v337 = vpack.c.b16 %v299, %v297
    %v338 = vpack.c.b16 %v300, %v298
    %v339 = vpack.c.b16 %v303, %v301
    %v340 = vpack.c.b16 %v304, %v302
    %v341 = vpack.c.b16 %v307, %v305
    %v342 = vpack.c.b16 %v308, %v306
    %v343 = vpack.c.b16 %v311, %v309
    %v344 = vpack.c.b16 %v312, %v310
    %377 = vmatprep.subr.bf16.mxu0 %v328
    %378 = vmatpush1.bf16.msra.mxu0 %v327
    %379 = vmatprep.subr.bf16.mxu0 %v326
    %380 = vmatpush1.bf16.msra.mxu0 %v325
    %381 = vmatprep.subr.bf16.mxu0 %v324
    %382 = vmatpush1.bf16.msra.mxu0 %v323
    %383 = vmatprep.subr.bf16.mxu0 %v322
    %384 = vmatpush1.bf16.msra.mxu0 %v321
    %385 = vmatprep.subr.bf16.mxu0 %v320
    %386 = vmatpush1.bf16.msra.mxu0 %v319
    %387 = vmatprep.subr.bf16.mxu0 %v318
    %388 = vmatpush1.bf16.msra.mxu0 %v317
    %389 = vmatprep.subr.bf16.mxu0 %v316
    %390 = vmatpush1.bf16.msra.mxu0 %v315
    %391 = vmatprep.subr.bf16.mxu0 %v314
    %392 = vmatpush1.bf16.msra.mxu0 %v313
    %393 = vmatprep.subr.bf16.mxu0 %v344
    %394 = vmatpush2.bf16.msra.mxu0 %v343
    %395 = vmatprep.subr.bf16.mxu0 %v342
    %396 = vmatpush2.bf16.msra.mxu0 %v341
    %397 = vmatprep.subr.bf16.mxu0 %v340
    %398 = vmatpush2.bf16.msra.mxu0 %v339
    %399 = vmatprep.subr.bf16.mxu0 %v338
    %400 = vmatpush2.bf16.msra.mxu0 %v337
    %401 = vmatprep.subr.bf16.mxu0 %v336
    %402 = vmatpush2.bf16.msra.mxu0 %v335
    %403 = vmatprep.subr.bf16.mxu0 %v334
    %404 = vmatpush2.bf16.msra.mxu0 %v333
    %405 = vmatprep.subr.bf16.mxu0 %v332
    %406 = vmatpush2.bf16.msra.mxu0 %v331
    %407 = vmatprep.subr.bf16.mxu0 %v330
    %408 = vmatpush2.bf16.msra.mxu0 %v329
    %409 = vmatprep.mubr.bf16.mxu0 %v172
    %410 = vmatmul.mubr.bf16.gmra.mxu0 %v171
    %v411 = vpop.f32.mrf.mxu0
    %v412 = vadd.f32 %v210, %v411
    %v413 = vpop.f32.mrf.mxu0
    %v414 = vadd.f32 %v214, %v413
    %v415 = vpop.f32.mrf.mxu0
    %v416 = vpop.f32.mrf.mxu0
    %417 = vdwg.mxu0
    %v418 = vpack.c.bf16 %v412, %v412
    %v419 = vpack.c.bf16 %v414, %v414
    %v420 = vmax.bf16 %v418, 0
    %v421 = vmax.bf16 %v419, 0
    %v422 = vld [vmem:[#allocation8] sm:$0xff]
    %v423 = vld [vmem:[#allocation8 + $0x8] sm:$0xff]
    %v424 = vld [vmem:[#allocation8 + $0x10] sm:$0xff]
    %v425 = vld [vmem:[#allocation8 + $0x18] sm:$0xff]
    %v426 = vld [vmem:[#allocation8 + $0x20] sm:$0xff]
    %v427 = vld [vmem:[#allocation8 + $0x28] sm:$0xff]
    %v428 = vld [vmem:[#allocation8 + $0x30] sm:$0xff]
    %v429 = vld [vmem:[#allocation8 + $0x38] sm:$0xff]
    %v430 = vld [vmem:[#allocation8 + $0x40] sm:$0xff]
    %v431 = vld [vmem:[#allocation8 + $0x48] sm:$0xff]
    %v432 = vld [vmem:[#allocation8 + $0x50] sm:$0xff]
    %v433 = vld [vmem:[#allocation8 + $0x58] sm:$0xff]
    %v434 = vld [vmem:[#allocation8 + $0x60] sm:$0xff]
    %v435 = vld [vmem:[#allocation8 + $0x68] sm:$0xff]
    %v436 = vld [vmem:[#allocation8 + $0x70] sm:$0xff]
    %v437 = vld [vmem:[#allocation8 + $0x78] sm:$0xff]
    %v438 = vld [vmem:[#allocation8 + $0x80] sm:$0xff]
    %v439 = vld [vmem:[#allocation8 + $0x88] sm:$0xff]
    %v440 = vld [vmem:[#allocation8 + $0x90] sm:$0xff]
    %v441 = vld [vmem:[#allocation8 + $0x98] sm:$0xff]
    %v442 = vld [vmem:[#allocation8 + $0xa0] sm:$0xff]
    %v443 = vld [vmem:[#allocation8 + $0xa8] sm:$0xff]
    %v444 = vld [vmem:[#allocation8 + $0xb0] sm:$0xff]
    %v445 = vld [vmem:[#allocation8 + $0xb8] sm:$0xff]
    %v446 = vld [vmem:[#allocation8 + $0xc0] sm:$0xff]
    %v447 = vld [vmem:[#allocation8 + $0xc8] sm:$0xff]
    %v448 = vld [vmem:[#allocation8 + $0xd0] sm:$0xff]
    %v449 = vld [vmem:[#allocation8 + $0xd8] sm:$0xff]
    %v450 = vld [vmem:[#allocation8 + $0xe0] sm:$0xff]
    %v451 = vld [vmem:[#allocation8 + $0xe8] sm:$0xff]
    %v452 = vld [vmem:[#allocation8 + $0xf0] sm:$0xff]
    %v453 = vld [vmem:[#allocation8 + $0xf8] sm:$0xff]
    %v454 = vld [vmem:[%s6] sm:$0x3]
    %v456 = vlaneseq
    %v457 = vshrl.u32 %v456, 7
    %v458 = vsub.s32 0, %v457
    %v459 = vrot.slane %v454, %v458
    %v460 = vlaneseq
    %v461 = vshrl.u32 %v460, 7
    %v462 = vsub.s32 1, %v461
    %v463 = vrot.slane %v454, %v462
    %v498 = vunpack.c.l.b16 %v422
    %v499 = vunpack.c.h.b16 %v422
    %v500 = vunpack.c.l.b16 %v423
    %v501 = vunpack.c.h.b16 %v423
    %v502 = vunpack.c.l.b16 %v424
    %v503 = vunpack.c.h.b16 %v424
    %v504 = vunpack.c.l.b16 %v425
    %v505 = vunpack.c.h.b16 %v425
    %v506 = vunpack.c.l.b16 %v426
    %v507 = vunpack.c.h.b16 %v426
    %v508 = vunpack.c.l.b16 %v427
    %v509 = vunpack.c.h.b16 %v427
    %v510 = vunpack.c.l.b16 %v428
    %v511 = vunpack.c.h.b16 %v428
    %v512 = vunpack.c.l.b16 %v429
    %v513 = vunpack.c.h.b16 %v429
    %v514 = vunpack.c.l.b16 %v430
    %v515 = vunpack.c.h.b16 %v430
    %v516 = vunpack.c.l.b16 %v431
    %v517 = vunpack.c.h.b16 %v431
    %v518 = vunpack.c.l.b16 %v432
    %v519 = vunpack.c.h.b16 %v432
    %v520 = vunpack.c.l.b16 %v433
    %v521 = vunpack.c.h.b16 %v433
    %v522 = vunpack.c.l.b16 %v434
    %v523 = vunpack.c.h.b16 %v434
    %v524 = vunpack.c.l.b16 %v435
    %v525 = vunpack.c.h.b16 %v435
    %v526 = vunpack.c.l.b16 %v436
    %v527 = vunpack.c.h.b16 %v436
    %v528 = vunpack.c.l.b16 %v437
    %v529 = vunpack.c.h.b16 %v437
    %v530 = vunpack.c.l.b16 %v438
    %v531 = vunpack.c.h.b16 %v438
    %v532 = vunpack.c.l.b16 %v439
    %v533 = vunpack.c.h.b16 %v439
    %v534 = vunpack.c.l.b16 %v440
    %v535 = vunpack.c.h.b16 %v440
    %v536 = vunpack.c.l.b16 %v441
    %v537 = vunpack.c.h.b16 %v441
    %v538 = vunpack.c.l.b16 %v442
    %v539 = vunpack.c.h.b16 %v442
    %v540 = vunpack.c.l.b16 %v443
    %v541 = vunpack.c.h.b16 %v443
    %v542 = vunpack.c.l.b16 %v444
    %v543 = vunpack.c.h.b16 %v444
    %v544 = vunpack.c.l.b16 %v445
    %v545 = vunpack.c.h.b16 %v445
    %v546 = vunpack.c.l.b16 %v446
    %v547 = vunpack.c.h.b16 %v446
    %v548 = vunpack.c.l.b16 %v447
    %v549 = vunpack.c.h.b16 %v447
    %v550 = vunpack.c.l.b16 %v448
    %v551 = vunpack.c.h.b16 %v448
    %v552 = vunpack.c.l.b16 %v449
    %v553 = vunpack.c.h.b16 %v449
    %v554 = vunpack.c.l.b16 %v450
    %v555 = vunpack.c.h.b16 %v450
    %v556 = vunpack.c.l.b16 %v451
    %v557 = vunpack.c.h.b16 %v451
    %v558 = vunpack.c.l.b16 %v452
    %v559 = vunpack.c.h.b16 %v452
    %v560 = vunpack.c.l.b16 %v453
    %v561 = vunpack.c.h.b16 %v453
    %v562 = vpack.c.b16 %v500, %v498
    %v563 = vpack.c.b16 %v501, %v499
    %v564 = vpack.c.b16 %v504, %v502
    %v565 = vpack.c.b16 %v505, %v503
    %v566 = vpack.c.b16 %v508, %v506
    %v567 = vpack.c.b16 %v509, %v507
    %v568 = vpack.c.b16 %v512, %v510
    %v569 = vpack.c.b16 %v513, %v511
    %v570 = vpack.c.b16 %v516, %v514
    %v571 = vpack.c.b16 %v517, %v515
    %v572 = vpack.c.b16 %v520, %v518
    %v573 = vpack.c.b16 %v521, %v519
    %v574 = vpack.c.b16 %v524, %v522
    %v575 = vpack.c.b16 %v525, %v523
    %v576 = vpack.c.b16 %v528, %v526
    %v577 = vpack.c.b16 %v529, %v527
    %v578 = vpack.c.b16 %v532, %v530
    %v579 = vpack.c.b16 %v533, %v531
    %v580 = vpack.c.b16 %v536, %v534
    %v581 = vpack.c.b16 %v537, %v535
    %v582 = vpack.c.b16 %v540, %v538
    %v583 = vpack.c.b16 %v541, %v539
    %v584 = vpack.c.b16 %v544, %v542
    %v585 = vpack.c.b16 %v545, %v543
    %v586 = vpack.c.b16 %v548, %v546
    %v587 = vpack.c.b16 %v549, %v547
    %v588 = vpack.c.b16 %v552, %v550
    %v589 = vpack.c.b16 %v553, %v551
    %v590 = vpack.c.b16 %v556, %v554
    %v591 = vpack.c.b16 %v557, %v555
    %v592 = vpack.c.b16 %v560, %v558
    %v593 = vpack.c.b16 %v561, %v559
    %626 = vmatprep.subr.bf16.mxu0 %v577
    %627 = vmatpush1.bf16.msra.mxu0 %v576
    %628 = vmatprep.subr.bf16.mxu0 %v575
    %629 = vmatpush1.bf16.msra.mxu0 %v574
    %630 = vmatprep.subr.bf16.mxu0 %v573
    %631 = vmatpush1.bf16.msra.mxu0 %v572
    %632 = vmatprep.subr.bf16.mxu0 %v571
    %633 = vmatpush1.bf16.msra.mxu0 %v570
    %634 = vmatprep.subr.bf16.mxu0 %v569
    %635 = vmatpush1.bf16.msra.mxu0 %v568
    %636 = vmatprep.subr.bf16.mxu0 %v567
    %637 = vmatpush1.bf16.msra.mxu0 %v566
    %638 = vmatprep.subr.bf16.mxu0 %v565
    %639 = vmatpush1.bf16.msra.mxu0 %v564
    %640 = vmatprep.subr.bf16.mxu0 %v563
    %641 = vmatpush1.bf16.msra.mxu0 %v562
    %642 = vmatprep.subr.bf16.mxu0 %v593
    %643 = vmatpush2.bf16.msra.mxu0 %v592
    %644 = vmatprep.subr.bf16.mxu0 %v591
    %645 = vmatpush2.bf16.msra.mxu0 %v590
    %646 = vmatprep.subr.bf16.mxu0 %v589
    %647 = vmatpush2.bf16.msra.mxu0 %v588
    %648 = vmatprep.subr.bf16.mxu0 %v587
    %649 = vmatpush2.bf16.msra.mxu0 %v586
    %650 = vmatprep.subr.bf16.mxu0 %v585
    %651 = vmatpush2.bf16.msra.mxu0 %v584
    %652 = vmatprep.subr.bf16.mxu0 %v583
    %653 = vmatpush2.bf16.msra.mxu0 %v582
    %654 = vmatprep.subr.bf16.mxu0 %v581
    %655 = vmatpush2.bf16.msra.mxu0 %v580
    %656 = vmatprep.subr.bf16.mxu0 %v579
    %657 = vmatpush2.bf16.msra.mxu0 %v578
    %658 = vmatprep.mubr.bf16.mxu0 %v421
    %659 = vmatmul.mubr.bf16.gmra.mxu0 %v420
    %v660 = vpop.f32.mrf.mxu0
    %v661 = vadd.f32 %v459, %v660
    %v662 = vpop.f32.mrf.mxu0
    %v663 = vadd.f32 %v463, %v662
    %v664 = vpop.f32.mrf.mxu0
    %v665 = vpop.f32.mrf.mxu0
    %666 = vdwg.mxu0
    %v667 = vpack.c.bf16 %v661, %v661
    %v668 = vpack.c.bf16 %v663, %v663
    %v671 = vunpack.c.l.b16 %v667
    %v672 = vunpack.c.l.b16 %v668
    %v673 = vpack.c.b16 %v672, %v671
    %675 = vst [vmem:[#allocation10] sm:$0xff] %v673
    // Predicated region
    $region46: #{tpu_custom_call.1} parent=1 // pred_check
      _
    $region47: #{tpu_custom_call.1} parent=1 // pred_check_branch
      %677 = sbr.rel (0) target = $region49
    $region48: #{tpu_custom_call.1} parent=1 // pred_region
      %s679 = ssub.s32 128, 128
      %680 = vsyncadd [#allocation4], %s679
      %s682 = sshll.u32 [#allocation10], 4
      %s683 = int_to_ptr.vmem [resolvable:$true] %s682
      %685 = dma.vmem_to_hbm [thread:$0]  %s683, 128, %s7, [#allocation4]
    $region49: #{tpu_custom_call.1} parent=1 // pred_fallthru
      _
    // Predicated region
    $region50: #{tpu_custom_call.1} parent=1 // pred_check
      _
    $region51: #{tpu_custom_call.1} parent=1 // pred_check_branch
      %687 = sbr.rel (0) target = $region53
    $region52: #{tpu_custom_call.1} parent=1 // pred_region
      %688 = dma.done [#allocation4], 128
    $region53: #{tpu_custom_call.1} parent=1 // pred_fallthru
      _
    %689 = vsyncpa [#allocation3], 1
    %690 = vsyncpa [#allocation6], 1
    %691 = vsyncpa [#allocation9], 1
    %692 = vsyncpa [#allocation4], 1

</llo_original>
